<compile_context>
chip_gen: v6e
topology: v6e:2x2x1
jax: 0.10.0
libtpu: 0.0.40
codegen_flags: <defaults>
</compile_context>

<pallas_src>
import math

import jax
import jax.numpy as jnp
from jax import lax
from jax.experimental import pallas as pl
from jax.experimental.pallas import tpu as pltpu


# ---------------------------------------------------------------------------
# helpers
# ---------------------------------------------------------------------------

def _pad2(shape):
    s = list(shape)
    if len(s) >= 1:
        s[-1] = -(-s[-1] // 128) * 128
    if len(s) >= 2:
        s[-2] = -(-s[-2] // 8) * 8
    return s


def _buf_bytes(shape, dtype):
    return int(math.prod(_pad2(shape))) * jnp.dtype(dtype).itemsize


def _pick_row_tile(n, b):
    """Row tile for the point cloud; prefer an even total grid (v7x 2 TCs)."""
    if n <= 256:
        cands = [n]
    else:
        cands = [t for t in (512, 256, 128, 64, 32, 16, 8) if n % t == 0] or [n]
    for t in cands:
        if (b * (n // t)) % 2 == 0:
            return t
    return cands[0]


def _pick_hw_tile(hw, c):
    """HW chunk for the streaming image-stats kernel (~2 MiB per buffer)."""
    max_rows = max(8, (2 * 1024 * 1024) // (max(c, 1) * 4))
    if hw <= max_rows:
        return hw
    best = None
    t = 8
    while t <= max_rows:
        if hw % t == 0:
            best = t
        t += 8
    return best if best is not None else hw


# ---------------------------------------------------------------------------
# Image statistics kernel: (B, HW, C) -> per-(B, C) mean and sqrt(var+eps)
# Single pass (sum + sum-of-squares), HW streamed through an arbitrary axis.
# ---------------------------------------------------------------------------

def _make_stats_kernel(hw_total):
    inv_n = 1.0 / hw_total
    inv_nm1 = 1.0 / (hw_total - 1)

    def kernel(img_ref, mu_ref, sig_ref, s1_ref, s2_ref):
        c = pl.program_id(1)

        @pl.when(c == 0)
        def _():
            s1_ref[...] = jnp.zeros_like(s1_ref)
            s2_ref[...] = jnp.zeros_like(s2_ref)

        x = img_ref[0].astype(jnp.float32)            # (THW, C), C on lanes
        s1_ref[...] += jnp.sum(x, axis=0, keepdims=True)
        s2_ref[...] += jnp.sum(x * x, axis=0, keepdims=True)

        @pl.when(c == pl.num_programs(1) - 1)
        def _():
            mu = s1_ref[...] * inv_n
            var = (s2_ref[...] - hw_total * mu * mu) * inv_nm1
            mu_ref[0] = mu
            sig_ref[0] = jnp.sqrt(jnp.maximum(var, 0.0) + 1e-8)

    return kernel


def image_stats(img_hwc):
    B, HW, C = img_hwc.shape
    thw = _pick_hw_tile(HW, C)
    return pl.pallas_call(
        _make_stats_kernel(HW),
        out_shape=(jax.ShapeDtypeStruct((B, 1, C), jnp.float32),
                   jax.ShapeDtypeStruct((B, 1, C), jnp.float32)),
        grid=(B, HW // thw),
        in_specs=[pl.BlockSpec((1, thw, C), lambda b, c: (b, c, 0))],
        out_specs=(pl.BlockSpec((1, 1, C), lambda b, c: (b, 0, 0)),
                   pl.BlockSpec((1, 1, C), lambda b, c: (b, 0, 0))),
        scratch_shapes=[pltpu.VMEM((1, C), jnp.float32),
                        pltpu.VMEM((1, C), jnp.float32)],
        compiler_params=pltpu.CompilerParams(
            dimension_semantics=("parallel", "arbitrary")),
    )(img_hwc)


# ---------------------------------------------------------------------------
# Host-side bilinear gather tables (indices are clipped like XLA's gather).
# ---------------------------------------------------------------------------

def _projection_tables(init_pc, scale_shapes):
    B, N = init_pc.shape[:2]
    X, Y, Z = init_pc[..., 0], init_pc[..., 1], init_pc[..., 2]
    h = jnp.clip(248.0 * Y / Z + 111.5, 0.0, 223.0)
    w = jnp.clip(248.0 * (-X) / Z + 111.5, 0.0, 223.0)
    idx_parts, wt_parts = [], []
    for (Hs, Ws) in scale_shapes:
        xs = h / (223.0 / (Hs - 1.0))
        ys = w / (223.0 / (Ws - 1.0))
        x1, x2 = jnp.floor(xs), jnp.ceil(xs)
        y1, y2 = jnp.floor(ys), jnp.ceil(ys)
        w11 = (x2 - xs) * (y2 - ys)
        w21 = (xs - x1) * (y2 - ys)
        w12 = (x2 - xs) * (ys - y1)
        w22 = (xs - x1) * (ys - y1)
        x1i = jnp.clip(x1.astype(jnp.int32), 0, Hs - 1)
        x2i = jnp.clip(x2.astype(jnp.int32), 0, Hs - 1)
        y1i = jnp.clip(y1.astype(jnp.int32), 0, Ws - 1)
        y2i = jnp.clip(y2.astype(jnp.int32), 0, Ws - 1)
        # tap order: (11, 21, 12, 22)
        idx_parts += [x1i * Ws + y1i, x2i * Ws + y1i,
                      x1i * Ws + y2i, x2i * Ws + y2i]
        wt_parts += [w11, w21, w12, w22]
    idx = jnp.stack(idx_parts, axis=1).reshape(B, -1).astype(jnp.int32)  # (B, 4S*N)
    wts = jnp.stack(wt_parts, axis=-1).astype(jnp.float32)               # (B, N, 4S)
    return idx, wts


# ---------------------------------------------------------------------------
# Fused encoder kernel: MLP blocks + AdaIN + fc + bilinear gather + concat
# ---------------------------------------------------------------------------

def _make_fused_kernel(n_layers, n_scales, cat_pc, use_proj, mm_dtype,
                       tn, n_total, out_pad, static_gather):
    """Ref layout (positional):
      [idx_ref (SMEM scalar prefetch, if use_proj)]
      pc_ref (1, TN, 3)
      per layer: w1, b1, w2, b2, fcw, fcb, mu, sig           (8 refs each)
      [wts_ref (1, TN, 4S)] [img refs (1, HW_s, C_s) x S]    (if use_proj)
      o_ref (1, TN, out_pad)
      [gather scratch: 4 x (TN, C_s) per scale]              (if use_proj)
    """

    def kernel(*refs):
        refs = list(refs)
        pos = 0
        idx_ref = None
        if use_proj:
            idx_ref = refs[pos]; pos += 1
        pc_ref = refs[pos]; pos += 1
        layer_refs = []
        for _ in range(n_layers):
            layer_refs.append(refs[pos:pos + 8]); pos += 8
        wts_ref, img_refs = None, []
        if use_proj:
            wts_ref = refs[pos]; pos += 1
            img_refs = refs[pos:pos + n_scales]; pos += n_scales
        o_ref = refs[pos]; pos += 1
        q_refs = []
        if use_proj:
            for _ in range(n_scales):
                q_refs.append(refs[pos:pos + 4]); pos += 4

        b = pl.program_id(0)
        t = pl.program_id(1)
        pc = pc_ref[0]                                      # (TN, 3) f32

        # Zero-init the lane-padded output tile once (covers the pad columns),
        # then overwrite each piece at its static lane offset as it is made.
        o_ref[0] = jnp.zeros((tn, out_pad), jnp.float32)

        off = 0
        # ---- point-cloud MLP blocks fused with AdaIN + fc (all in VMEM) ----
        x = pc
        for (w1, b1, w2, b2, fcw, fcb, mu_r, sig_r) in layer_refs:
            h = jnp.dot(x.astype(mm_dtype), w1[...],
                        preferred_element_type=jnp.float32) + b1[...]
            h = jnp.maximum(h, 0.0)                         # relu1
            x = jnp.dot(h.astype(mm_dtype), w2[...],
                        preferred_element_type=jnp.float32) + b2[...]
            x = jnp.maximum(x, 0.0)                         # relu2

            d = x.shape[-1]
            mu = jnp.mean(x, axis=-1, keepdims=True)
            cen = x - mu                                    # reused for var & norm
            var = jnp.sum(cen * cen, axis=-1, keepdims=True) * (1.0 / (d - 1))
            xn = cen * lax.rsqrt(var + 1e-8)                # EUP rsqrt
            ada = (xn + mu_r[0]) * sig_r[0]                 # image stats precomputed
            y = jnp.dot(ada.astype(mm_dtype), fcw[...],
                        preferred_element_type=jnp.float32) + fcb[...]
            o_ref[0, :, off:off + d] = y
            off += d

        # ---- bilinear projection: 4-row gather per point + VPU combine -----
        if use_proj:
            def gather_point(p):
                gp = t * tn + p
                for s in range(n_scales):
                    img_r = img_refs[s]
                    for tap in range(4):
                        i = idx_ref[b, (4 * s + tap) * n_total + gp]
                        q_refs[s][tap][pl.ds(p, 1), :] = img_r[0, pl.ds(i, 1), :]

            if static_gather:
                # Static unroll: store indices are compile-time constants.
                for p in range(tn):
                    gather_point(p)
            else:
                # TODO(synk): large-tile path (dynamic-row scatter into scratch);
                # swap for a per-point HBM row DMA gather when maps outgrow VMEM.
                def body(p, carry):
                    gather_point(p)
                    return carry
                lax.fori_loop(0, tn, body, 0)

            wblk = wts_ref[0]                               # (TN, 4S) f32
            for s in range(n_scales):
                cs = q_refs[s][0].shape[-1]
                piece = None
                for tap in range(4):
                    w = wblk[:, 4 * s + tap:4 * s + tap + 1]
                    contrib = q_refs[s][tap][...].astype(jnp.float32) * w
                    piece = contrib if piece is None else piece + contrib
                o_ref[0, :, off:off + cs] = piece
                off += cs

        if cat_pc:
            d = pc.shape[-1]
            o_ref[0, :, off:off + d] = pc
            off += d

    return kernel


# ---------------------------------------------------------------------------
# Wrapper
# ---------------------------------------------------------------------------

def point_cloud_encoder(params, img_feats, init_pc, cat_pc=True, use_adain=True,
                        use_proj=True, row_tile=None, matmul_dtype=jnp.bfloat16):
    """Fused PointCloudEncoder forward pass (single pallas_call).

    img_feats: list of NCHW arrays (B, C_i, H_i, W_i) with C_i == out_features[i].
    init_pc:   (B, N, 3) point cloud.
    """
    B, N, Din = init_pc.shape
    # NCHW -> (B, H*W, C): channels on the lane axis.
    img_hwcs = [
        jnp.transpose(f, (0, 2, 3, 1)).reshape(f.shape[0], f.shape[2] * f.shape[3], f.shape[1])
        for f in img_feats
    ]
    scale_shapes = [(f.shape[2], f.shape[3]) for f in img_feats]

    TN = row_tile if row_tile is not None else _pick_row_tile(N, B)
    assert N % TN == 0, (N, TN)

    inputs, in_specs = [], []
    vmem = 0

    def add_resident(arr):          # weights/biases: constant index_map, resident
        nonlocal vmem
        inputs.append(arr)
        in_specs.append(pl.BlockSpec(arr.shape, lambda *a, _n=arr.ndim: (0,) * _n))
        vmem += 2 * _buf_bytes(arr.shape, arr.dtype)

    def add_block(arr, block, imap):
        nonlocal vmem
        inputs.append(arr)
        in_specs.append(pl.BlockSpec(block, imap))
        vmem += 2 * _buf_bytes(block, arr.dtype)

    # Point cloud: tiled along rows (rows folded into the matmul M dimension).
    add_block(init_pc, (1, TN, Din), lambda b, t, *_: (b, t, 0))

    out_cols = 0
    n_layers = 0
    if use_adain:
        blocks, fcs = params["blocks"], params["fcs"]
        n_layers = len(blocks)
        for blk, fc, img in zip(blocks, fcs, img_hwcs):
            mu, sig = image_stats(img)                       # (B, 1, C) f32 each
            add_resident(blk["w1"].astype(matmul_dtype))
            add_resident(blk["b1"].reshape(1, -1))
            add_resident(blk["w2"].astype(matmul_dtype))
            add_resident(blk["b2"].reshape(1, -1))
            add_resident(fc["w"].astype(matmul_dtype))
            add_resident(fc["b"].reshape(1, -1))
            add_block(mu, (1, 1) + mu.shape[2:], lambda b, t, *_: (b, 0, 0))
            add_block(sig, (1, 1) + sig.shape[2:], lambda b, t, *_: (b, 0, 0))
            out_cols += fc["w"].shape[1]

    idx = None
    scale_chan = []
    if use_proj:
        idx, wts = _projection_tables(init_pc, scale_shapes)
        add_block(wts, (1, TN, wts.shape[-1]), lambda b, t, *_: (b, t, 0))
        for img in img_hwcs:
            imk = img.astype(matmul_dtype)
            add_block(imk, (1,) + imk.shape[1:], lambda b, t, *_: (b, 0, 0))
            scale_chan.append(imk.shape[-1])
            out_cols += imk.shape[-1]
    if cat_pc:
        out_cols += Din

    # Lane-dense (128-padded) output; padding sliced off below.
    out_pad = -(-out_cols // 128) * 128
    vmem += 2 * _buf_bytes((1, TN, out_pad), jnp.float32)

    scratch = []
    if use_proj:
        for c in scale_chan:
            for _ in range(4):
                scratch.append(pltpu.VMEM((TN, c), matmul_dtype))
                vmem += _buf_bytes((TN, c), matmul_dtype)

    static_gather = TN <= 64
    kernel = _make_fused_kernel(n_layers, len(scale_chan), cat_pc, use_proj,
                                matmul_dtype, TN, N, out_pad, static_gather)

    grid_spec = pltpu.PrefetchScalarGridSpec(
        num_scalar_prefetch=1 if use_proj else 0,
        grid=(B, N // TN),
        in_specs=in_specs,
        out_specs=pl.BlockSpec((1, TN, out_pad), lambda b, t, *_: (b, t, 0)),
        scratch_shapes=scratch)

    # Derive the scoped-VMEM budget from the actual block footprints
    # (conservatively double-buffered) instead of a fixed constant.
    vmem_limit = int(min(110 * 1024 * 1024, max(32 * 1024 * 1024, vmem + (4 << 20))))

    call = pl.pallas_call(
        kernel,
        out_shape=jax.ShapeDtypeStruct((B, N, out_pad), jnp.float32),
        grid_spec=grid_spec,
        compiler_params=pltpu.CompilerParams(
            dimension_semantics=("parallel", "parallel"),
            vmem_limit_bytes=vmem_limit))

    args = ([idx] if use_proj else []) + inputs
    res = call(*args)
    return res[..., :out_cols]


# ---------------------------------------------------------------------------
# Parameter construction (deterministic, PyTorch-Linear-like init)
# ---------------------------------------------------------------------------

def _linear_params(key, fan_in, fan_out):
    kw, kb = jax.random.split(key)
    bound = 1.0 / math.sqrt(fan_in)
    w = jax.random.uniform(kw, (fan_in, fan_out), jnp.float32, -bound, bound)
    b = jax.random.uniform(kb, (fan_out,), jnp.float32, -bound, bound)
    return w, b


def init_encoder_params(key, in_features, out_features):
    params = {"blocks": [], "fcs": []}
    dim = in_features
    for of in out_features:
        key, k1, k2, k3 = jax.random.split(key, 4)
        w1, b1 = _linear_params(k1, dim, of)
        w2, b2 = _linear_params(k2, of, of)
        params["blocks"].append({"w1": w1, "b1": b1, "w2": w2, "b2": b2})
        fw, fb = _linear_params(k3, of, of)
        params["fcs"].append({"w": fw, "b": fb})
        dim = of
    return params


# ---------------------------------------------------------------------------
# Pure-JAX reference (mirrors the PyTorch forward exactly)
# ---------------------------------------------------------------------------

def ref_forward(params, img_feats, init_pc):
    pc_feats = []
    out = init_pc
    enc = []
    for blk in params["blocks"]:
        h = jnp.maximum(out @ blk["w1"] + blk["b1"], 0.0)
        out = jnp.maximum(h @ blk["w2"] + blk["b2"], 0.0)
        enc.append(out)
    for pc_feat, img_feat, fc in zip(enc, img_feats, params["fcs"]):
        D = pc_feat.shape[-1]
        mu = pc_feat.mean(-1, keepdims=True)
        var = ((pc_feat - mu) ** 2).sum(-1, keepdims=True) / (D - 1)
        pcn = (pc_feat - mu) / jnp.sqrt(var + 1e-8)
        Bb, C, H_, W_ = img_feat.shape
        flat = img_feat.reshape(Bb, C, H_ * W_)
        imu = flat.mean(-1)
        ivar = ((flat - imu[..., None]) ** 2).sum(-1) / (H_ * W_ - 1)
        o = (pcn + imu[:, None, :]) * jnp.sqrt(ivar + 1e-8)[:, None, :]
        pc_feats.append(o @ fc["w"] + fc["b"])
    for img_feat in img_feats:
        Bb, C, H_, W_ = img_feat.shape
        X, Y, Z = init_pc[..., 0], init_pc[..., 1], init_pc[..., 2]
        h = jnp.clip(248.0 * Y / Z + 111.5, 0.0, 223.0)
        w = jnp.clip(248.0 * -X / Z + 111.5, 0.0, 223.0)
        x = h / (223.0 / (H_ - 1.0))
        y = w / (223.0 / (W_ - 1.0))
        x1, x2 = jnp.floor(x), jnp.ceil(x)
        y1, y2 = jnp.floor(y), jnp.ceil(y)

        def g(img_b, xb, yb):
            return img_b[:, xb.astype(jnp.int32), yb.astype(jnp.int32)]  # (C, N)

        q11 = jax.vmap(g)(img_feat, x1, y1)
        q21 = jax.vmap(g)(img_feat, x2, y1)
        q12 = jax.vmap(g)(img_feat, x1, y2)
        q22 = jax.vmap(g)(img_feat, x2, y2)
        feats = (q11 * ((x2 - x) * (y2 - y))[:, None, :]
                 + q21 * ((x - x1) * (y2 - y))[:, None, :]
                 + q12 * ((x2 - x) * (y - y1))[:, None, :]
                 + q22 * ((x - x1) * (y - y1))[:, None, :])
        pc_feats.append(jnp.transpose(feats, (0, 2, 1)))
    pc_feats.append(init_pc)
    return jnp.concatenate(pc_feats, -1)


# ---------------------------------------------------------------------------

if __name__ == "__main__":
    key = jax.random.PRNGKey(0)
    B, N = 2, 8
    in_features = 3
    out_features = [16, 32]
    H = W = 16

    key, kxy, kz, kp, *kimg = jax.random.split(key, 4 + len(out_features))
    xy = 0.5 * jax.random.normal(kxy, (B, N, 2), jnp.float32)
    z = 2.0 + 2.0 * jax.random.uniform(kz, (B, N, 1), jnp.float32)
    init_pc = jnp.concatenate([xy, z], axis=-1)                        # (B, N, 3)

    img_feats = [jax.random.normal(k, (B, c, H, W), jnp.float32)
                 for k, c in zip(kimg, out_features)]                   # NCHW

    params = init_encoder_params(kp, in_features, out_features)

    ref = jax.block_until_ready(ref_forward(params, img_feats, init_pc))

    # f32 MXU path: tight check against the f32 reference.
    out_f32 = jax.block_until_ready(
        point_cloud_encoder(params, img_feats, init_pc, matmul_dtype=jnp.float32))
    assert out_f32.shape == ref.shape, (out_f32.shape, ref.shape)
    err_f32 = float(jnp.max(jnp.abs(out_f32 - ref)))
    assert jnp.allclose(out_f32, ref, rtol=1e-3, atol=1e-3), err_f32

    # bf16 MXU path (default for v5e/v6e/v7x throughput): loose sanity bound.
    out_bf16 = jax.block_until_ready(
        point_cloud_encoder(params, img_feats, init_pc, matmul_dtype=jnp.bfloat16))
    err_bf16 = float(jnp.max(jnp.abs(out_bf16 - ref)))
    assert err_bf16 < 0.5, err_bf16

    print("KERNEL_OK")
</pallas_src>

<mosaic_0001>
module attributes {stable_mosaic.version = 11 : i64} {
  func.func @kernel(%arg0: i32, %arg1: i32, %arg2: memref<1x256x16xf32, #tpu.memory_space<vmem>>, %arg3: memref<1x1x16xf32, #tpu.memory_space<vmem>>, %arg4: memref<1x1x16xf32, #tpu.memory_space<vmem>>, %arg5: memref<1x16xf32, #tpu.memory_space<vmem>>, %arg6: memref<1x16xf32, #tpu.memory_space<vmem>>) attributes {dimension_semantics = [#tpu.dimension_semantics<parallel>, #tpu.dimension_semantics<arbitrary>], iteration_bounds = array<i64: 2, 1>, scalar_prefetch = 0 : i64, scratch_operands = 2 : i64, tpu.core_type = #tpu.core_type<tc>, window_params = [{transform_indices = @transform_0, window_bounds = array<i64: 1, 256, 16>}, {transform_indices = @transform_1, window_bounds = array<i64: 1, 1, 16>}, {transform_indices = @transform_2, window_bounds = array<i64: 1, 1, 16>}]} {
    %c0_i32 = arith.constant 0 : i32
    %0 = arith.cmpi eq, %arg1, %c0_i32 : i32
    %1 = arith.extui %0 : i1 to i32
    %c0_i32_0 = arith.constant 0 : i32
    %2 = arith.cmpi ne, %1, %c0_i32_0 : i32
    scf.if %2 {
      %cst_14 = arith.constant 0.000000e+00 : f32
      %19 = vector.broadcast %cst_14 : f32 to vector<1x16xf32>
      %c0_15 = arith.constant 0 : index
      %c0_16 = arith.constant 0 : index
      %20 = vector.load %arg5[%c0_15, %c0_16] : memref<1x16xf32, #tpu.memory_space<vmem>>, vector<1x16xf32>
      tpu.vector_store %arg5[%c0_15, %c0_16], %19 {strides = array<i32>} : memref<1x16xf32, #tpu.memory_space<vmem>>, vector<1x16xf32>,
      %cst_17 = arith.constant 0.000000e+00 : f32
      %21 = vector.broadcast %cst_17 : f32 to vector<1x16xf32>
      %c0_18 = arith.constant 0 : index
      %c0_19 = arith.constant 0 : index
      %22 = vector.load %arg6[%c0_18, %c0_19] : memref<1x16xf32, #tpu.memory_space<vmem>>, vector<1x16xf32>
      tpu.vector_store %arg6[%c0_18, %c0_19], %21 {strides = array<i32>} : memref<1x16xf32, #tpu.memory_space<vmem>>, vector<1x16xf32>,
    } else {
    }
    %c0 = arith.constant 0 : index
    %c0_1 = arith.constant 0 : index
    %c0_2 = arith.constant 0 : index
    %3 = vector.load %arg2[%c0, %c0_1, %c0_2] : memref<1x256x16xf32, #tpu.memory_space<vmem>>, vector<1x256x16xf32>
    %4 = vector.shape_cast %3 : vector<1x256x16xf32> to vector<256x16xf32>
    %c0_3 = arith.constant 0 : index
    %c0_4 = arith.constant 0 : index
    %5 = vector.load %arg5[%c0_3, %c0_4] : memref<1x16xf32, #tpu.memory_space<vmem>>, vector<1x16xf32>
    %cst = arith.constant dense<0.000000e+00> : vector<16xf32>
    %6 = vector.multi_reduction <add>, %4, %cst [0] : vector<256x16xf32> to vector<16xf32>
    %7 = vector.shape_cast %6 : vector<16xf32> to vector<1x16xf32>
    %8 = arith.addf %5, %7 : vector<1x16xf32>
    %c0_5 = arith.constant 0 : index
    %c0_6 = arith.constant 0 : index
    %9 = vector.load %arg5[%c0_5, %c0_6] : memref<1x16xf32, #tpu.memory_space<vmem>>, vector<1x16xf32>
    tpu.vector_store %arg5[%c0_5, %c0_6], %8 {strides = array<i32>} : memref<1x16xf32, #tpu.memory_space<vmem>>, vector<1x16xf32>,
    %c0_7 = arith.constant 0 : index
    %c0_8 = arith.constant 0 : index
    %10 = vector.load %arg6[%c0_7, %c0_8] : memref<1x16xf32, #tpu.memory_space<vmem>>, vector<1x16xf32>
    %11 = arith.mulf %4, %4 : vector<256x16xf32>
    %cst_9 = arith.constant dense<0.000000e+00> : vector<16xf32>
    %12 = vector.multi_reduction <add>, %11, %cst_9 [0] : vector<256x16xf32> to vector<16xf32>
    %13 = vector.shape_cast %12 : vector<16xf32> to vector<1x16xf32>
    %14 = arith.addf %10, %13 : vector<1x16xf32>
    %c0_10 = arith.constant 0 : index
    %c0_11 = arith.constant 0 : index
    %15 = vector.load %arg6[%c0_10, %c0_11] : memref<1x16xf32, #tpu.memory_space<vmem>>, vector<1x16xf32>
    tpu.vector_store %arg6[%c0_10, %c0_11], %14 {strides = array<i32>} : memref<1x16xf32, #tpu.memory_space<vmem>>, vector<1x16xf32>,
    %c0_i32_12 = arith.constant 0 : i32
    %16 = arith.cmpi eq, %arg1, %c0_i32_12 : i32
    %17 = arith.extui %16 : i1 to i32
    %c0_i32_13 = arith.constant 0 : i32
    %18 = arith.cmpi ne, %17, %c0_i32_13 : i32
    scf.if %18 {
      %c0_14 = arith.constant 0 : index
      %c0_15 = arith.constant 0 : index
      %19 = vector.load %arg5[%c0_14, %c0_15] : memref<1x16xf32, #tpu.memory_space<vmem>>, vector<1x16xf32>
      %cst_16 = arith.constant 3.906250e-03 : f32
      %20 = vector.broadcast %cst_16 : f32 to vector<1x16xf32>
      %21 = arith.mulf %19, %20 : vector<1x16xf32>
      %c0_17 = arith.constant 0 : index
      %c0_18 = arith.constant 0 : index
      %22 = vector.load %arg6[%c0_17, %c0_18] : memref<1x16xf32, #tpu.memory_space<vmem>>, vector<1x16xf32>
      %cst_19 = arith.constant 2.560000e+02 : f32
      %23 = vector.broadcast %cst_19 : f32 to vector<1x16xf32>
      %24 = arith.mulf %23, %21 : vector<1x16xf32>
      %25 = arith.mulf %24, %21 : vector<1x16xf32>
      %26 = arith.subf %22, %25 : vector<1x16xf32>
      %cst_20 = arith.constant 0.00392156886 : f32
      %27 = vector.broadcast %cst_20 : f32 to vector<1x16xf32>
      %28 = arith.mulf %26, %27 : vector<1x16xf32>
      %c0_21 = arith.constant 0 : index
      %c0_22 = arith.constant 0 : index
      %c0_23 = arith.constant 0 : index
      %29 = vector.load %arg3[%c0_21, %c0_22, %c0_23] : memref<1x1x16xf32, #tpu.memory_space<vmem>>, vector<1x1x16xf32>
      %30 = vector.shape_cast %29 : vector<1x1x16xf32> to vector<1x16xf32>
      %31 = vector.shape_cast %21 : vector<1x16xf32> to vector<1x1x16xf32>
      tpu.vector_store %arg3[%c0_21, %c0_22, %c0_23], %31 {strides = array<i32>} : memref<1x1x16xf32, #tpu.memory_space<vmem>>, vector<1x1x16xf32>,
      %cst_24 = arith.constant 0.000000e+00 : f32
      %32 = vector.broadcast %cst_24 : f32 to vector<1x16xf32>
      %33 = arith.maximumf %28, %32 : vector<1x16xf32>
      %cst_25 = arith.constant 9.99999993E-9 : f32
      %34 = vector.broadcast %cst_25 : f32 to vector<1x16xf32>
      %35 = arith.addf %33, %34 : vector<1x16xf32>
      %36 = math.sqrt %35 : vector<1x16xf32>
      %c0_26 = arith.constant 0 : index
      %c0_27 = arith.constant 0 : index
      %c0_28 = arith.constant 0 : index
      %37 = vector.load %arg4[%c0_26, %c0_27, %c0_28] : memref<1x1x16xf32, #tpu.memory_space<vmem>>, vector<1x1x16xf32>
      %38 = vector.shape_cast %37 : vector<1x1x16xf32> to vector<1x16xf32>
      %39 = vector.shape_cast %36 : vector<1x16xf32> to vector<1x1x16xf32>
      tpu.vector_store %arg4[%c0_26, %c0_27, %c0_28], %39 {strides = array<i32>} : memref<1x1x16xf32, #tpu.memory_space<vmem>>, vector<1x1x16xf32>,
    } else {
    }
    return
  }
  func.func @transform_0(%arg0: i32, %arg1: i32) -> (i32, i32, i32) {
    %c0_i32 = arith.constant 0 : i32
    %c0_i32_0 = arith.constant 0 : i32
    return %arg0, %arg1, %c0_i32 : i32, i32, i32
  }
  func.func @transform_1(%arg0: i32, %arg1: i32) -> (i32, i32, i32) {
    %c0_i32 = arith.constant 0 : i32
    %c0_i32_0 = arith.constant 0 : i32
    %c0_i32_1 = arith.constant 0 : i32
    return %arg0, %c0_i32, %c0_i32_0 : i32, i32, i32
  }
  func.func @transform_2(%arg0: i32, %arg1: i32) -> (i32, i32, i32) {
    %c0_i32 = arith.constant 0 : i32
    %c0_i32_0 = arith.constant 0 : i32
    %c0_i32_1 = arith.constant 0 : i32
    return %arg0, %c0_i32, %c0_i32_0 : i32, i32, i32
  }
}

</mosaic_0001>

<llo_original>
// kernel: tpu_custom_call.1
$region0: #{tpu_custom_call.1}
  #allocation0 [shape = 'u32[]', space=smem, size = 0x4, offset = 0x4, fixed_abs, tag = 'smem constant byte address 0x4 - core index']
  #allocation1 [shape = 'u32[144,128]{1,0:T(1,128)}', space=vmem, size = 0x12000, scoped, tag = 'internal scratch']
  #allocation2 [shape = 'f32[1,16]{1,0:T(1,128)}', space=vmem, size = 0x200, scoped, tag = 'scratch operand']
  #allocation3 [shape = 'f32[1,16]{1,0:T(1,128)}', space=vmem, size = 0x200, scoped, tag = 'scratch operand']
  %s0 = inlined_call_operand.vmem [shape: f32[2,256,16], index: 0, kind: input, shape index: {}]
  %s1 = inlined_call_operand.hbm [shape: f32[2,1,16], index: 1, kind: output, shape index: {0}]
  %s2 = inlined_call_operand.hbm [shape: f32[2,1,16], index: 2, kind: output, shape index: {1}]
  %3 = xla_tuple %s1, %s2
  %s4 = sld [smem:[#allocation0]]
  $region53: #{tpu_custom_call.1} parent=0
    _
  %s6 = ssub.s32 1, %s4
  %s7 = scalar_select 0, %s6, %s4
  $region1: #{tpu_custom_call.1} parent=0
    #allocation4 [shape = 'u8[1024]{0}', space=vmem, size = 0x400, scoped, tag = 'output window, operand 0']
    #allocation5 [shape = 's32[2]{0}', space=sflag, size = 0x8, scoped, tag = 'scoped memory for tpu_custom_call.1']
    #allocation6 [shape = 'u8[1024]{0}', space=vmem, size = 0x400, scoped, tag = 'output window, operand 1']
    #allocation7 [shape = 's32[2]{0}', space=sflag, size = 0x8, scoped, tag = 'scoped memory for tpu_custom_call.1']
    %8 = vsyncpa [#allocation5], 0
    %s9 = scalar_lea.sflag [#allocation5], 1
    %10 = vsyncpa %s9, 0
    %11 = vsyncpa [#allocation7], 0
    %s12 = scalar_lea.sflag [#allocation7], 1
    %13 = vsyncpa %s12, 0
    loop: start=0, step=1, limit=4
    $region2: #{tpu_custom_call.1} parent=1 // loop_pre_header
      _
    $region3: #{tpu_custom_call.1} parent=1 // loop_header
      %s15 = sphi 0, %s19
      %p16 = scmp.ge.s32.totalorder %s15, 4
      %s22 = sphi 0, %s34
      %s23 = sphi 0, %s30
      %s24 = sphi 0, %s22
      %s25 = sphi 0, %s23
      %s26 = sphi 0, %s24
      %s27 = sphi 0, %s25
      %s39 = sphi 0, %s41
      %s42 = sphi 0, %s39
      %s43 = sphi 0, %s42
      %s59 = sphi 0, %s43
      %s65 = sphi 0, %s67
      %s68 = sphi 0, %s65
      %s69 = sphi 0, %s68
      %s85 = sphi 0, %s69
      %s91 = sphi 0, %s93
      %s94 = sphi 0, %s91
      %s95 = sphi 0, %s94
      %s111 = sphi 0, %s95
    $region4: #{tpu_custom_call.1} parent=1 // loop_header_branch
      %18 = sbr.rel (%p16) target = $region8
    $region5: #{tpu_custom_call.1} parent=1 // loop_body
      %s20 = ssub.s32 %s15, 1
      %s21 = ssub.s32 %s15, 2
      %s28 = sadd.s32 1, %s23
      %p29 = scmp.ge.s32.totalorder %s28, 1
      %s30 = scalar_select %p29, 0, %s28
      %s31 = sadd.s32 1, %s22
      %s32 = scalar_select %p29, %s31, %s22
      %p33 = scmp.ge.s32.totalorder %s32, 2
      %s34 = scalar_select %p33, 0, %s32
      %s35 = ssub.s32 %s22, %s34
      %s36 = ssub.s32 %s23, %s30
      %s37 = sor.u32 %s35, %s36
      %p38 = scmp.eq.s32.totalorder %s37, 0
      %s40 = sadd.s32 %s39, 1
      %s41 = scalar_select %p38, %s39, %s40
      %p44 = pneg %p38
      %p45 = scmp.eq.s32.totalorder %s15, 1
      %p46 = por %p44, %p45
      %p47 = scmp.ne.s32.totalorder %s39, %s42
      %p48 = scmp.eq.s32.totalorder %s15, 0
      %p49 = por %p47, %p48
      %p50 = scmp.ne.s32.totalorder %s39, %s42
      %p51 = scmp.eq.s32.totalorder %s20, 1
      %p52 = por %p50, %p51
      %p53 = scmp.ne.s32.totalorder %s42, %s43
      %p54 = scmp.eq.s32.totalorder %s20, 0
      %p55 = por %p53, %p54
      %p56 = scmp.ne.s32.totalorder %s42, %s43
      %p57 = scmp.eq.s32.totalorder %s21, 1
      %p58 = por %p56, %p57
      %p60 = scmp.ne.s32.totalorder %s43, %s59
      %p61 = scmp.eq.s32.totalorder %s21, 0
      %p62 = por %p60, %p61
      %s63 = ssub.s32 %s22, %s34
      %p64 = scmp.eq.s32.totalorder %s63, 0
      %s66 = sadd.s32 %s65, 1
      %s67 = scalar_select %p64, %s65, %s66
      %p70 = pneg %p64
      %p71 = scmp.eq.s32.totalorder %s15, 1
      %p72 = por %p70, %p71
      %p73 = scmp.ne.s32.totalorder %s65, %s68
      %p74 = scmp.eq.s32.totalorder %s15, 0
      %p75 = por %p73, %p74
      %p76 = scmp.ne.s32.totalorder %s65, %s68
      %p77 = scmp.eq.s32.totalorder %s20, 1
      %p78 = por %p76, %p77
      %p79 = scmp.ne.s32.totalorder %s68, %s69
      %p80 = scmp.eq.s32.totalorder %s20, 0
      %p81 = por %p79, %p80
      %p82 = scmp.ne.s32.totalorder %s68, %s69
      %p83 = scmp.eq.s32.totalorder %s21, 1
      %p84 = por %p82, %p83
      %p86 = scmp.ne.s32.totalorder %s69, %s85
      %p87 = scmp.eq.s32.totalorder %s21, 0
      %p88 = por %p86, %p87
      %s89 = ssub.s32 %s22, %s34
      %p90 = scmp.eq.s32.totalorder %s89, 0
      %s92 = sadd.s32 %s91, 1
      %s93 = scalar_select %p90, %s91, %s92
      %p96 = pneg %p90
      %p97 = scmp.eq.s32.totalorder %s15, 1
      %p98 = por %p96, %p97
      %p99 = scmp.ne.s32.totalorder %s91, %s94
      %p100 = scmp.eq.s32.totalorder %s15, 0
      %p101 = por %p99, %p100
      %p102 = scmp.ne.s32.totalorder %s91, %s94
      %p103 = scmp.eq.s32.totalorder %s20, 1
      %p104 = por %p102, %p103
      %p105 = scmp.ne.s32.totalorder %s94, %s95
      %p106 = scmp.eq.s32.totalorder %s20, 0
      %p107 = por %p105, %p106
      %p108 = scmp.ne.s32.totalorder %s94, %s95
      %p109 = scmp.eq.s32.totalorder %s21, 1
      %p110 = por %p108, %p109
      %p112 = scmp.ne.s32.totalorder %s95, %s111
      %p113 = scmp.eq.s32.totalorder %s21, 0
      %p114 = por %p112, %p113
      %p115 = scmp.le.s32.totalorder 1, %s15
      %p116 = scmp.lt.s32.totalorder %s15, 3
      %p117 = pnand %p115, %p116
      %p118 = pneg %p117
      // Predicated region
      $region9: #{tpu_custom_call.1} parent=5 // pred_check
        _
      $region10: #{tpu_custom_call.1} parent=5 // pred_check_branch
        %120 = sbr.rel (%p117) target = $region12
      $region11: #{tpu_custom_call.1} parent=5 // pred_region
        %s121 = ssub.s32 %s15, 1
      $region12: #{tpu_custom_call.1} parent=5 // pred_fallthru
        _
      %p122 = scmp.lt.s32.totalorder %s15, 2
      // Predicated region
      $region13: #{tpu_custom_call.1} parent=5 // pred_check
        %p123 = pneg %p122
      $region14: #{tpu_custom_call.1} parent=5 // pred_check_branch
        %125 = sbr.rel (%p123) target = $region16
      $region15: #{tpu_custom_call.1} parent=5 // pred_region
        // Predicated region
        $region17: #{tpu_custom_call.1} parent=15 // pred_check
          %p126 = pneg %p49
        $region18: #{tpu_custom_call.1} parent=15 // pred_check_branch
          %128 = sbr.rel (%p126) target = $region20
        $region19: #{tpu_custom_call.1} parent=15 // pred_region
          %s129 = smul.u32 32, %s23
          %p130 = scmp.lt.s32.totalorder %s22, 1
          %s131 = scalar_select %p130, %s22, 1
          %p132 = scmp.lt.s32.totalorder %s129, 31
          %s133 = scalar_select %p132, %s129, 31
          %s134 = smul.addr %s131, 32
          %s135 = sadd.s32 %s133, %s134
          %s136 = smul.addr %s135, 8
          %s137 = scalar_lea.vmem %s0, %s136
          %s138 = smul.u32 32, %s23
        $region20: #{tpu_custom_call.1} parent=15 // pred_fallthru
          _
      $region16: #{tpu_custom_call.1} parent=5 // pred_fallthru
        _
      %p139 = scmp.le.s32.totalorder 1, %s15
      %p140 = scmp.lt.s32.totalorder %s15, 3
      %p141 = pnand %p139, %p140
      %p142 = pneg %p141
      // Predicated region
      $region21: #{tpu_custom_call.1} parent=5 // pred_check
        _
      $region22: #{tpu_custom_call.1} parent=5 // pred_check_branch
        %144 = sbr.rel (%p141) target = $region24
      $region23: #{tpu_custom_call.1} parent=5 // pred_region
        %s145 = ssub.s32 %s15, 1
        %s146 = smul.u32 32, %s25
        %p147 = scmp.lt.s32.totalorder %s24, 1
        %s148 = scalar_select %p147, %s24, 1
        %p149 = scmp.lt.s32.totalorder %s146, 31
        %s150 = scalar_select %p149, %s146, 31
        %s151 = smul.addr %s148, 32
        %s152 = sadd.s32 %s150, %s151
        %s153 = smul.addr %s152, 8
        %s154 = scalar_lea.vmem %s0, %s153
        %p155 = pneg %p55
        %p156 = pneg %p52
        %p157 = pneg %p81
        %p158 = pneg %p78
        %s159 = sand.u32 %s68, 1
        %s160 = scalar_lea.sflag [#allocation5], %s159
        %s161 = sand.u32 %s68, 1
        %s162 = scalar_lea.vmem [#allocation4], %s161
        %p163 = pneg %p107
        %p164 = pneg %p104
        %s165 = sand.u32 %s94, 1
        %s166 = scalar_lea.sflag [#allocation7], %s165
        %s167 = sand.u32 %s94, 1
        %s168 = scalar_lea.vmem [#allocation6], %s167
        %s169 = smul.u32 32, %s25
        %p170 = scmp.lt.s32.totalorder %s24, 1
        %s171 = scalar_select %p170, %s24, 1
        %p172 = scmp.lt.s32.totalorder %s169, 31
        %s173 = scalar_select %p172, %s169, 31
        %s174 = smul.addr %s171, 32
        %s175 = sadd.s32 %s173, %s174
        %s176 = smul.addr %s175, 8
        %s177 = scalar_lea.vmem %s0, %s176
        %s178 = smul.u32 32, %s25
        %p179 = scmp.eq.s32.totalorder %s25, 0
        // Predicated region
        $region25: #{tpu_custom_call.1} parent=23 // pred_check
          %p180 = pneg %p179
        $region26: #{tpu_custom_call.1} parent=23 // pred_check_branch
          %182 = sbr.rel (%p180) target = $region28
        $region27: #{tpu_custom_call.1} parent=23 // pred_region
          %vm183 = vcmask 122880
          %184 = vst.msk [vmem:[#allocation2] sm:$0x1] %vm183, 0.0
          %185 = vst.msk [vmem:[#allocation3] sm:$0x1] %vm183, 0.0
        $region28: #{tpu_custom_call.1} parent=23 // pred_fallthru
          _
        %v186 = vld [vmem:[%s177] sm:$0xff]
        %v187 = vld [vmem:[%s177 + $0x8] sm:$0xff]
        %v188 = vld [vmem:[%s177 + $0x10] sm:$0xff]
        %v189 = vld [vmem:[%s177 + $0x18] sm:$0xff]
        %v190 = vld [vmem:[%s177 + $0x20] sm:$0xff]
        %v191 = vld [vmem:[%s177 + $0x28] sm:$0xff]
        %v192 = vld [vmem:[%s177 + $0x30] sm:$0xff]
        %v193 = vld [vmem:[%s177 + $0x38] sm:$0xff]
        %v194 = vld [vmem:[%s177 + $0x40] sm:$0xff]
        %v195 = vld [vmem:[%s177 + $0x48] sm:$0xff]
        %v196 = vld [vmem:[%s177 + $0x50] sm:$0xff]
        %v197 = vld [vmem:[%s177 + $0x58] sm:$0xff]
        %v198 = vld [vmem:[%s177 + $0x60] sm:$0xff]
        %v199 = vld [vmem:[%s177 + $0x68] sm:$0xff]
        %v200 = vld [vmem:[%s177 + $0x70] sm:$0xff]
        %v201 = vld [vmem:[%s177 + $0x78] sm:$0xff]
        %v202 = vld [vmem:[%s177 + $0x80] sm:$0xff]
        %v203 = vld [vmem:[%s177 + $0x88] sm:$0xff]
        %v204 = vld [vmem:[%s177 + $0x90] sm:$0xff]
        %v205 = vld [vmem:[%s177 + $0x98] sm:$0xff]
        %v206 = vld [vmem:[%s177 + $0xa0] sm:$0xff]
        %v207 = vld [vmem:[%s177 + $0xa8] sm:$0xff]
        %v208 = vld [vmem:[%s177 + $0xb0] sm:$0xff]
        %v209 = vld [vmem:[%s177 + $0xb8] sm:$0xff]
        %v210 = vld [vmem:[%s177 + $0xc0] sm:$0xff]
        %v211 = vld [vmem:[%s177 + $0xc8] sm:$0xff]
        %v212 = vld [vmem:[%s177 + $0xd0] sm:$0xff]
        %v213 = vld [vmem:[%s177 + $0xd8] sm:$0xff]
        %v214 = vld [vmem:[%s177 + $0xe0] sm:$0xff]
        %v215 = vld [vmem:[%s177 + $0xe8] sm:$0xff]
        %v216 = vld [vmem:[%s177 + $0xf0] sm:$0xff]
        %v217 = vld [vmem:[%s177 + $0xf8] sm:$0xff]
        %v218 = vld [vmem:[#allocation2] sm:$0x1]
        %vm219 = vcmask 130048
        %v220 = vsel %vm219, %v186, 0.0
        %v221 = vsel %vm219, %v187, 0.0
        %v222 = vadd.f32 %v220, %v221
        %v223 = vsel %vm219, %v188, 0.0
        %v224 = vadd.f32 %v222, %v223
        %v225 = vsel %vm219, %v189, 0.0
        %v226 = vadd.f32 %v224, %v225
        %v227 = vsel %vm219, %v190, 0.0
        %v228 = vadd.f32 %v226, %v227
        %v229 = vsel %vm219, %v191, 0.0
        %v230 = vadd.f32 %v228, %v229
        %v231 = vsel %vm219, %v192, 0.0
        %v232 = vadd.f32 %v230, %v231
        %v233 = vsel %vm219, %v193, 0.0
        %v234 = vadd.f32 %v232, %v233
        %v235 = vsel %vm219, %v194, 0.0
        %v236 = vadd.f32 %v234, %v235
        %v237 = vsel %vm219, %v195, 0.0
        %v238 = vadd.f32 %v236, %v237
        %v239 = vsel %vm219, %v196, 0.0
        %v240 = vadd.f32 %v238, %v239
        %v241 = vsel %vm219, %v197, 0.0
        %v242 = vadd.f32 %v240, %v241
        %v243 = vsel %vm219, %v198, 0.0
        %v244 = vadd.f32 %v242, %v243
        %v245 = vsel %vm219, %v199, 0.0
        %v246 = vadd.f32 %v244, %v245
        %v247 = vsel %vm219, %v200, 0.0
        %v248 = vadd.f32 %v246, %v247
        %v249 = vsel %vm219, %v201, 0.0
        %v250 = vadd.f32 %v248, %v249
        %v251 = vsel %vm219, %v202, 0.0
        %v252 = vadd.f32 %v250, %v251
        %v253 = vsel %vm219, %v203, 0.0
        %v254 = vadd.f32 %v252, %v253
        %v255 = vsel %vm219, %v204, 0.0
        %v256 = vadd.f32 %v254, %v255
        %v257 = vsel %vm219, %v205, 0.0
        %v258 = vadd.f32 %v256, %v257
        %v259 = vsel %vm219, %v206, 0.0
        %v260 = vadd.f32 %v258, %v259
        %v261 = vsel %vm219, %v207, 0.0
        %v262 = vadd.f32 %v260, %v261
        %v263 = vsel %vm219, %v208, 0.0
        %v264 = vadd.f32 %v262, %v263
        %v265 = vsel %vm219, %v209, 0.0
        %v266 = vadd.f32 %v264, %v265
        %v267 = vsel %vm219, %v210, 0.0
        %v268 = vadd.f32 %v266, %v267
        %v269 = vsel %vm219, %v211, 0.0
        %v270 = vadd.f32 %v268, %v269
        %v271 = vsel %vm219, %v212, 0.0
        %v272 = vadd.f32 %v270, %v271
        %v273 = vsel %vm219, %v213, 0.0
        %v274 = vadd.f32 %v272, %v273
        %v275 = vsel %vm219, %v214, 0.0
        %v276 = vadd.f32 %v274, %v275
        %v277 = vsel %vm219, %v215, 0.0
        %v278 = vadd.f32 %v276, %v277
        %v279 = vsel %vm219, %v216, 0.0
        %v280 = vadd.f32 %v278, %v279
        %v281 = vsel %vm219, %v217, 0.0
        %v282 = vadd.f32 %v280, %v281
        %v283 = vrot.slane %v282, 4
        %v284 = vadd.f32 %v282, %v283
        %v285 = vrot.slane %v284, 2
        %v286 = vadd.f32 %v284, %v285
        %v287 = vrot.slane %v286, 1
        %v288 = vadd.f32 %v286, %v287
        %v289 = vadd.f32 %v218, %v288
        %vm290 = vcmask 122880
        %291 = vst.msk [vmem:[#allocation2] sm:$0x1] %vm290, %v289
        %v292 = vld [vmem:[#allocation3] sm:$0x1]
        %v293 = vmul.f32 %v186, %v186
        %v294 = vmul.f32 %v187, %v187
        %v295 = vmul.f32 %v188, %v188
        %v296 = vmul.f32 %v189, %v189
        %v297 = vmul.f32 %v190, %v190
        %v298 = vmul.f32 %v191, %v191
        %v299 = vmul.f32 %v192, %v192
        %v300 = vmul.f32 %v193, %v193
        %v301 = vmul.f32 %v194, %v194
        %v302 = vmul.f32 %v195, %v195
        %v303 = vmul.f32 %v196, %v196
        %v304 = vmul.f32 %v197, %v197
        %v305 = vmul.f32 %v198, %v198
        %v306 = vmul.f32 %v199, %v199
        %v307 = vmul.f32 %v200, %v200
        %v308 = vmul.f32 %v201, %v201
        %v309 = vmul.f32 %v202, %v202
        %v310 = vmul.f32 %v203, %v203
        %v311 = vmul.f32 %v204, %v204
        %v312 = vmul.f32 %v205, %v205
        %v313 = vmul.f32 %v206, %v206
        %v314 = vmul.f32 %v207, %v207
        %v315 = vmul.f32 %v208, %v208
        %v316 = vmul.f32 %v209, %v209
        %v317 = vmul.f32 %v210, %v210
        %v318 = vmul.f32 %v211, %v211
        %v319 = vmul.f32 %v212, %v212
        %v320 = vmul.f32 %v213, %v213
        %v321 = vmul.f32 %v214, %v214
        %v322 = vmul.f32 %v215, %v215
        %v323 = vmul.f32 %v216, %v216
        %v324 = vmul.f32 %v217, %v217
        %v325 = vsel %vm219, %v293, 0.0
        %v326 = vsel %vm219, %v294, 0.0
        %v327 = vadd.f32 %v325, %v326
        %v328 = vsel %vm219, %v295, 0.0
        %v329 = vadd.f32 %v327, %v328
        %v330 = vsel %vm219, %v296, 0.0
        %v331 = vadd.f32 %v329, %v330
        %v332 = vsel %vm219, %v297, 0.0
        %v333 = vadd.f32 %v331, %v332
        %v334 = vsel %vm219, %v298, 0.0
        %v335 = vadd.f32 %v333, %v334
        %v336 = vsel %vm219, %v299, 0.0
        %v337 = vadd.f32 %v335, %v336
        %v338 = vsel %vm219, %v300, 0.0
        %v339 = vadd.f32 %v337, %v338
        %v340 = vsel %vm219, %v301, 0.0
        %v341 = vadd.f32 %v339, %v340
        %v342 = vsel %vm219, %v302, 0.0
        %v343 = vadd.f32 %v341, %v342
        %v344 = vsel %vm219, %v303, 0.0
        %v345 = vadd.f32 %v343, %v344
        %v346 = vsel %vm219, %v304, 0.0
        %v347 = vadd.f32 %v345, %v346
        %v348 = vsel %vm219, %v305, 0.0
        %v349 = vadd.f32 %v347, %v348
        %v350 = vsel %vm219, %v306, 0.0
        %v351 = vadd.f32 %v349, %v350
        %v352 = vsel %vm219, %v307, 0.0
        %v353 = vadd.f32 %v351, %v352
        %v354 = vsel %vm219, %v308, 0.0
        %v355 = vadd.f32 %v353, %v354
        %v356 = vsel %vm219, %v309, 0.0
        %v357 = vadd.f32 %v355, %v356
        %v358 = vsel %vm219, %v310, 0.0
        %v359 = vadd.f32 %v357, %v358
        %v360 = vsel %vm219, %v311, 0.0
        %v361 = vadd.f32 %v359, %v360
        %v362 = vsel %vm219, %v312, 0.0
        %v363 = vadd.f32 %v361, %v362
        %v364 = vsel %vm219, %v313, 0.0
        %v365 = vadd.f32 %v363, %v364
        %v366 = vsel %vm219, %v314, 0.0
        %v367 = vadd.f32 %v365, %v366
        %v368 = vsel %vm219, %v315, 0.0
        %v369 = vadd.f32 %v367, %v368
        %v370 = vsel %vm219, %v316, 0.0
        %v371 = vadd.f32 %v369, %v370
        %v372 = vsel %vm219, %v317, 0.0
        %v373 = vadd.f32 %v371, %v372
        %v374 = vsel %vm219, %v318, 0.0
        %v375 = vadd.f32 %v373, %v374
        %v376 = vsel %vm219, %v319, 0.0
        %v377 = vadd.f32 %v375, %v376
        %v378 = vsel %vm219, %v320, 0.0
        %v379 = vadd.f32 %v377, %v378
        %v380 = vsel %vm219, %v321, 0.0
        %v381 = vadd.f32 %v379, %v380
        %v382 = vsel %vm219, %v322, 0.0
        %v383 = vadd.f32 %v381, %v382
        %v384 = vsel %vm219, %v323, 0.0
        %v385 = vadd.f32 %v383, %v384
        %v386 = vsel %vm219, %v324, 0.0
        %v387 = vadd.f32 %v385, %v386
        %v388 = vrot.slane %v387, 4
        %v389 = vadd.f32 %v387, %v388
        %v390 = vrot.slane %v389, 2
        %v391 = vadd.f32 %v389, %v390
        %v392 = vrot.slane %v391, 1
        %v393 = vadd.f32 %v391, %v392
        %v394 = vadd.f32 %v292, %v393
        %395 = vst.msk [vmem:[#allocation3] sm:$0x1] %vm290, %v394
        // Predicated region
        $region29: #{tpu_custom_call.1} parent=23 // pred_check
          %p396 = pneg %p179
        $region30: #{tpu_custom_call.1} parent=23 // pred_check_branch
          %398 = sbr.rel (%p396) target = $region32
        $region31: #{tpu_custom_call.1} parent=23 // pred_region
          %v399 = vld [vmem:[#allocation2] sm:$0x1]
          %v400 = vmul.f32 %v399, 0.00390625
          %v401 = vld [vmem:[#allocation3] sm:$0x1]
          %v402 = vmul.f32 %v400, 256.0
          %v403 = vmul.f32 %v402, %v400
          %v404 = vsub.f32 %v401, %v403
          %v405 = vmul.f32 %v404, 0.003921569
          %406 = vst.msk [vmem:[%s162] sm:$0x1] %vm290, %v400
          %v407 = vmax.f32 %v405, 0.0
          %v408 = vadd.f32 %v407, 1e-08
          %v409 = vrsqrt.pop %v408
          %v410 = vmul.f32 %v408, %v409
          %vm411 = vcmp.eq.f32.partialorder %v408, inf
          %v412 = vsel %vm411, %v408, %v410
          %vm413 = vcmp.eq.f32.partialorder %v408, 0.0
          %v414 = vand.u32 %v408, 2147483648
          %v415 = vsel %vm413, %v414, %v412
          %416 = vst.msk [vmem:[%s168] sm:$0x1] %vm290, %v415
        $region32: #{tpu_custom_call.1} parent=23 // pred_fallthru
          _
        %s417 = sand.u32 %s68, 1
        %s418 = scalar_lea.sflag [#allocation5], %s417
        %s419 = sand.u32 %s68, 1
        %s420 = scalar_lea.vmem [#allocation4], %s419
        %s421 = sand.u32 %s94, 1
        %s422 = scalar_lea.sflag [#allocation7], %s421
        %s423 = sand.u32 %s94, 1
        %s424 = scalar_lea.vmem [#allocation6], %s423
        // Predicated region
        $region33: #{tpu_custom_call.1} parent=23 // pred_check
          %p425 = pneg %p78
        $region34: #{tpu_custom_call.1} parent=23 // pred_check_branch
          %427 = sbr.rel (%p425) target = $region36
        $region35: #{tpu_custom_call.1} parent=23 // pred_region
          %s429 = ssub.s32 16, 16
          %430 = vsyncadd %s418, %s429
          %s431 = smul.addr %s24, 16
          %s432 = scalar_lea.hbm %s1, %s431
          %s434 = sshll.u32 %s420, 4
          %s435 = int_to_ptr.vmem [resolvable:$true] %s434
          %437 = dma.vmem_to_hbm [thread:$0]  %s435, 16, %s432, %s418
        $region36: #{tpu_custom_call.1} parent=23 // pred_fallthru
          _
        // Predicated region
        $region37: #{tpu_custom_call.1} parent=23 // pred_check
          %p438 = pneg %p104
        $region38: #{tpu_custom_call.1} parent=23 // pred_check_branch
          %440 = sbr.rel (%p438) target = $region40
        $region39: #{tpu_custom_call.1} parent=23 // pred_region
          %s442 = ssub.s32 16, 16
          %443 = vsyncadd %s422, %s442
          %s444 = smul.addr %s24, 16
          %s445 = scalar_lea.hbm %s2, %s444
          %s447 = sshll.u32 %s424, 4
          %s448 = int_to_ptr.vmem [resolvable:$true] %s447
          %450 = dma.vmem_to_hbm [thread:$0]  %s448, 16, %s445, %s422
        $region40: #{tpu_custom_call.1} parent=23 // pred_fallthru
          _
      $region24: #{tpu_custom_call.1} parent=5 // pred_fallthru
        _
      %p451 = scmp.le.s32.totalorder 2, %s15
      // Predicated region
      $region41: #{tpu_custom_call.1} parent=5 // pred_check
        %p452 = pneg %p451
      $region42: #{tpu_custom_call.1} parent=5 // pred_check_branch
        %454 = sbr.rel (%p452) target = $region44
      $region43: #{tpu_custom_call.1} parent=5 // pred_region
        %s455 = ssub.s32 %s15, 2
        // Predicated region
        $region45: #{tpu_custom_call.1} parent=43 // pred_check
          %p456 = pneg %p84
        $region46: #{tpu_custom_call.1} parent=43 // pred_check_branch
          %458 = sbr.rel (%p456) target = $region48
        $region47: #{tpu_custom_call.1} parent=43 // pred_region
          %s459 = sand.u32 %s69, 1
          %s460 = scalar_lea.sflag [#allocation5], %s459
          %s461 = sand.u32 %s69, 1
          %s462 = scalar_lea.vmem [#allocation4], %s461
          %463 = dma.done %s460, 16
        $region48: #{tpu_custom_call.1} parent=43 // pred_fallthru
          _
        // Predicated region
        $region49: #{tpu_custom_call.1} parent=43 // pred_check
          %p464 = pneg %p110
        $region50: #{tpu_custom_call.1} parent=43 // pred_check_branch
          %466 = sbr.rel (%p464) target = $region52
        $region51: #{tpu_custom_call.1} parent=43 // pred_region
          %s467 = sand.u32 %s95, 1
          %s468 = scalar_lea.sflag [#allocation7], %s467
          %s469 = sand.u32 %s95, 1
          %s470 = scalar_lea.vmem [#allocation6], %s469
          %471 = dma.done %s468, 16
        $region52: #{tpu_custom_call.1} parent=43 // pred_fallthru
          _
      $region44: #{tpu_custom_call.1} parent=5 // pred_fallthru
        _
    $region6: #{tpu_custom_call.1} parent=1 // loop_footer
      %s19 = sadd.s32 1, %s15
    $region7: #{tpu_custom_call.1} parent=1 // loop_footer_branch
      %14 = sbr.rel target = $region3
    $region8: #{tpu_custom_call.1} parent=1 // loop_exit
      _
    %472 = vsyncpa [#allocation5], 1
    %s473 = scalar_lea.sflag [#allocation5], 1
    %474 = vsyncpa %s473, 1
    %475 = vsyncpa [#allocation7], 1
    %s476 = scalar_lea.sflag [#allocation7], 1
    %477 = vsyncpa %s476, 1

</llo_original>
